<compile_context>
chip_gen: v5e
topology: v5e:2x2
jax: 0.10.0
libtpu: 0.0.40
codegen_flags: <defaults>
</compile_context>

<pallas_src>
import functools

import jax
import jax.numpy as jnp
import numpy as np
from jax.experimental import pallas as pl
from jax.experimental.pallas import tpu as pltpu

PAD = 20                     # self.padding_size in the PyTorch module
_BOX_LANES = PAD * 4         # lanes 0..79  : flattened box coords (f32 bits)
_LABEL_LO = _BOX_LANES       # lanes 80..99 : integer label ids
_LABEL_HI = _LABEL_LO + PAD
_COUNT_LANE = _LABEL_HI      # lane 100     : detection count
SLAB = 128                   # lane-dense slab width (both input and output)


def _florence2_pack_kernel(in_ref, out_ref, *, target_id):
    """in_ref : (bblk, 128) int32 packed slab, out_ref : (bblk, 128) float32."""
    bblk = in_ref.shape[0]

    slab_i = in_ref[...]                                   # one 128-lane load
    slab_f = pltpu.bitcast(slab_i, jnp.float32)            # box lanes as f32

    counts = slab_i[:, _COUNT_LANE:_COUNT_LANE + 1]        # (bblk, 1) i32
    lane = jax.lax.broadcasted_iota(jnp.int32, (bblk, SLAB), 1)

    # Box lanes: keep coord iff its detection slot < count  (lane < count*4).
    box_valid = (lane < _BOX_LANES) & (lane < counts * 4)
    # Logit lanes: 1.0 iff slot < count and label == target  (lane-80 < count).
    logit_one = ((lane >= _LABEL_LO) & (lane < _LABEL_HI)
                 & (lane < counts + _LABEL_LO)
                 & (slab_i == target_id))

    out = jnp.where(box_valid, slab_f, jnp.float32(0.0))
    out = jnp.where(logit_one, jnp.float32(1.0), out)
    out_ref[...] = out                                     # one 128-lane store


@functools.partial(jax.jit, static_argnames=("target_id",))
def florence2_pad_detections(boxes, label_ids, counts, *, target_id):
    """boxes: [B, PAD, 4] f32 (rows >= counts[b] may be garbage/NaN)
       label_ids: [B, PAD] int, counts: [B] int, target_id: static python int.
       Returns (prediction_boxes [B, PAD, 4] f32, prediction_logits [B, PAD, 1] f32)."""
    B = boxes.shape[0]

    # ---- wrapper-side packing into ONE lane-dense int32 slab -------------
    boxes_bits = jax.lax.bitcast_convert_type(
        boxes.astype(jnp.float32), jnp.int32).reshape(B, _BOX_LANES)
    labels_i = label_ids.astype(jnp.int32)
    counts_i = counts.astype(jnp.int32).reshape(B, 1)
    tail = jnp.zeros((B, SLAB - _COUNT_LANE - 1), jnp.int32)
    slab_in = jnp.concatenate([boxes_bits, labels_i, counts_i, tail], axis=1)

    # Batch block: as big as reasonable (per-step overhead dominates).
    bblk = min(2048, ((B + 7) // 8) * 8)
    Bp = ((B + bblk - 1) // bblk) * bblk
    if Bp != B:
        # Padded rows carry count=0 -> the kernel writes all-zero rows.
        slab_in = jnp.pad(slab_in, ((0, Bp - B), (0, 0)))

    slab_out = pl.pallas_call(
        functools.partial(_florence2_pack_kernel, target_id=int(target_id)),
        out_shape=jax.ShapeDtypeStruct((Bp, SLAB), jnp.float32),
        grid=(Bp // bblk,),
        in_specs=[pl.BlockSpec((bblk, SLAB), lambda i: (i, 0))],
        out_specs=pl.BlockSpec((bblk, SLAB), lambda i: (i, 0)),
        compiler_params=pltpu.CompilerParams(
            dimension_semantics=("parallel",)),
    )(slab_in)

    slab_out = slab_out[:B]
    prediction_boxes = slab_out[:, :_BOX_LANES].reshape(B, PAD, 4)
    prediction_logits = slab_out[:, _LABEL_LO:_LABEL_HI].reshape(B, PAD, 1)
    return prediction_boxes, prediction_logits


if __name__ == "__main__":
    key = jax.random.PRNGKey(0)
    k_img, k_box, k_lab = jax.random.split(key, 3)

    # Example forward inputs (small shapes): real module uses [B, 3, 768, 768]
    # images consumed only by the external foundation model.
    B = 2
    images = jax.random.normal(k_img, (B, 3, 16, 16), dtype=jnp.float32)
    h, w = 16, 16

    # Deterministic synthetic stand-in for the parsed foundation-model output.
    counts = jnp.array([3, 5], dtype=jnp.int32)                   # detections/image
    raw_boxes = jax.random.uniform(k_box, (B, PAD, 4), dtype=jnp.float32,
                                   minval=0.0, maxval=float(w))
    # Poison the rows beyond each image's count with NaN to prove the kernel
    # masks (selects) them out rather than multiplying them.
    slot3 = jnp.arange(PAD)[None, :, None]
    raw_boxes = jnp.where(slot3 >= counts[:, None, None], jnp.nan, raw_boxes)
    label_ids = jax.random.randint(k_lab, (B, PAD), 0, 3, dtype=jnp.int32)
    target_id = 0  # integer id standing in for self.target_class (a string)

    pred_boxes, pred_logits = florence2_pad_detections(
        raw_boxes, label_ids, counts, target_id=target_id)
    jax.block_until_ready((pred_boxes, pred_logits))

    # Reference check (numpy) of the compare / zero-pad / stack semantics.
    nb = np.asarray(raw_boxes)
    nl = np.asarray(label_ids)
    nc = np.asarray(counts)
    ref_boxes = np.zeros((B, PAD, 4), np.float32)
    ref_logits = np.zeros((B, PAD, 1), np.float32)
    for b in range(B):
        n = int(nc[b])
        ref_boxes[b, :n] = nb[b, :n]
        ref_logits[b, :n, 0] = (nl[b, :n] == target_id).astype(np.float32)
    assert pred_boxes.shape == (B, PAD, 4) and pred_logits.shape == (B, PAD, 1)
    np.testing.assert_allclose(np.asarray(pred_boxes), ref_boxes, rtol=0, atol=0)
    np.testing.assert_allclose(np.asarray(pred_logits), ref_logits, rtol=0, atol=0)

    print("KERNEL_OK")
</pallas_src>

<mosaic_0001>
module attributes {stable_mosaic.version = 11 : i64} {
  func.func @_florence2_pack_kernel(%arg0: i32, %arg1: memref<8x128xi32, #tpu.memory_space<vmem>>, %arg2: memref<8x128xf32, #tpu.memory_space<vmem>>) attributes {dimension_semantics = [#tpu.dimension_semantics<parallel>], iteration_bounds = array<i64: 1>, scalar_prefetch = 0 : i64, scratch_operands = 0 : i64, tpu.core_type = #tpu.core_type<tc>, window_params = [{transform_indices = @transform_0, window_bounds = array<i64: 8, 128>}, {transform_indices = @transform_1, window_bounds = array<i64: 8, 128>}]} {
    %c0 = arith.constant 0 : index
    %c0_0 = arith.constant 0 : index
    %0 = vector.load %arg1[%c0, %c0_0] : memref<8x128xi32, #tpu.memory_space<vmem>>, vector<8x128xi32>
    %1 = tpu.bitcast %0 : vector<8x128xi32> -> vector<8x128xf32>
    %2 = vector.extract_strided_slice %0 {offsets = [0, 100], sizes = [8, 1], strides = [1, 1]} : vector<8x128xi32> to vector<8x1xi32>
    %3 = tpu.iota {dimensions = array<i32: 1>} : vector<8x128xi32>
    %c80_i32 = arith.constant 80 : i32
    %4 = vector.broadcast %c80_i32 : i32 to vector<8x128xi32>
    %5 = arith.cmpi slt, %3, %4 : vector<8x128xi32>
    %c4_i32 = arith.constant 4 : i32
    %6 = vector.broadcast %c4_i32 : i32 to vector<8x1xi32>
    %7 = arith.muli %2, %6 : vector<8x1xi32>
    %8 = vector.broadcast %7 : vector<8x1xi32> to vector<8x128xi32>
    %9 = arith.cmpi slt, %3, %8 : vector<8x128xi32>
    %10 = arith.andi %5, %9 : vector<8x128xi1>
    %c80_i32_1 = arith.constant 80 : i32
    %11 = vector.broadcast %c80_i32_1 : i32 to vector<8x128xi32>
    %12 = arith.cmpi sge, %3, %11 : vector<8x128xi32>
    %c100_i32 = arith.constant 100 : i32
    %13 = vector.broadcast %c100_i32 : i32 to vector<8x128xi32>
    %14 = arith.cmpi slt, %3, %13 : vector<8x128xi32>
    %15 = arith.andi %12, %14 : vector<8x128xi1>
    %c80_i32_2 = arith.constant 80 : i32
    %16 = vector.broadcast %c80_i32_2 : i32 to vector<8x1xi32>
    %17 = arith.addi %2, %16 : vector<8x1xi32>
    %18 = vector.broadcast %17 : vector<8x1xi32> to vector<8x128xi32>
    %19 = arith.cmpi slt, %3, %18 : vector<8x128xi32>
    %20 = arith.andi %15, %19 : vector<8x128xi1>
    %c0_i32 = arith.constant 0 : i32
    %21 = vector.broadcast %c0_i32 : i32 to vector<8x128xi32>
    %22 = arith.cmpi eq, %0, %21 : vector<8x128xi32>
    %23 = arith.andi %20, %22 : vector<8x128xi1>
    %cst = arith.constant 0.000000e+00 : f32
    %24 = vector.broadcast %cst : f32 to vector<8x128xf32>
    %25 = arith.select %10, %1, %24 : vector<8x128xi1>, vector<8x128xf32>
    %cst_3 = arith.constant 1.000000e+00 : f32
    %26 = vector.broadcast %cst_3 : f32 to vector<8x128xf32>
    %27 = arith.select %23, %26, %25 : vector<8x128xi1>, vector<8x128xf32>
    %c0_4 = arith.constant 0 : index
    %c0_5 = arith.constant 0 : index
    %28 = vector.load %arg2[%c0_4, %c0_5] : memref<8x128xf32, #tpu.memory_space<vmem>>, vector<8x128xf32>
    tpu.vector_store %arg2[%c0_4, %c0_5], %27 {strides = array<i32>} : memref<8x128xf32, #tpu.memory_space<vmem>>, vector<8x128xf32>,
    return
  }
  func.func @transform_0(%arg0: i32) -> (i32, i32) {
    %c0_i32 = arith.constant 0 : i32
    %c0_i32_0 = arith.constant 0 : i32
    return %arg0, %c0_i32 : i32, i32
  }
  func.func @transform_1(%arg0: i32) -> (i32, i32) {
    %c0_i32 = arith.constant 0 : i32
    %c0_i32_0 = arith.constant 0 : i32
    return %arg0, %c0_i32 : i32, i32
  }
}

</mosaic_0001>

<llo_original>
// kernel: florence2_pad_detections.1
$region0: #{florence2_pad_detections.1}
  #allocation0 [shape = 'u32[]', space=smem, size = 0x4, offset = 0x4, fixed_abs, tag = 'smem constant byte address 0x4 - core index']
  #allocation1 [shape = 'u32[72,128]{1,0:T(1,128)}', space=vmem, size = 0x9000, scoped, tag = 'internal scratch']
  %s0 = inlined_call_operand.vmem [shape: s32[8,128], index: 0, kind: input, shape index: {}]
  %s1 = inlined_call_operand.vmem [shape: f32[8,128], index: 1, kind: output, shape index: {}]
  %s2 = sld [smem:[#allocation0]]
  $region14: #{florence2_pad_detections.1} parent=0
    _
  %s4 = ssub.s32 1, %s2
  %s5 = scalar_select 0, %s4, %s2
  // Predicated region
  $region2: #{florence2_pad_detections.1} parent=0 // pred_check
    _
  $region3: #{florence2_pad_detections.1} parent=0 // pred_check_branch
    %7 = sbr.rel (0) target = $region5
  $region4: #{florence2_pad_detections.1} parent=0 // pred_region
    _
  $region5: #{florence2_pad_detections.1} parent=0 // pred_fallthru
    _
  %v8 = vld [vmem:[%s0] sm:$0xff]
  %v10 = vlaneseq
  %v11 = vand.u32 %v10, 127
  %vm12 = vcmp.lt.s32.totalorder %v11, 80
  %v13 = vmul.u32 %v8, 4
  %14 = vset.pattern.permute.xlu0 100
  %15 = vperm.xlu0 %14, %v13
  %v16 = vpop.permute.xlu0 %15
  %vm17 = vcmp.lt.s32.totalorder %v11, %v16
  %vm18 = vmand %vm12, %vm17
  %vm19 = vcmp.ge.s32.totalorder %v11, 80
  %vm20 = vcmp.lt.s32.totalorder %v11, 100
  %vm21 = vmand %vm19, %vm20
  %v22 = vadd.s32 %v8, 80
  %23 = vset.pattern.permute.xlu0 100
  %24 = vperm.xlu0 %23, %v22
  %v25 = vpop.permute.xlu0 %24
  %vm26 = vcmp.lt.s32.totalorder %v11, %v25
  %vm27 = vmand %vm21, %vm26
  %vm28 = vcmp.eq.s32.totalorder %v8, 0
  %vm29 = vmand %vm27, %vm28
  %v30 = vsel %vm18, %v8, 0.0
  %v31 = vsel %vm29, 1.0, %v30
  %32 = vst [vmem:[%s1] sm:$0xff] %v31
  // Predicated region
  $region6: #{florence2_pad_detections.1} parent=0 // pred_check
    _
  $region7: #{florence2_pad_detections.1} parent=0 // pred_check_branch
    %34 = sbr.rel (0) target = $region9
  $region8: #{florence2_pad_detections.1} parent=0 // pred_region
    _
  $region9: #{florence2_pad_detections.1} parent=0 // pred_fallthru
    _
  // Predicated region
  $region10: #{florence2_pad_detections.1} parent=0 // pred_check
    _
  $region11: #{florence2_pad_detections.1} parent=0 // pred_check_branch
    %36 = sbr.rel (0) target = $region13
  $region12: #{florence2_pad_detections.1} parent=0 // pred_region
    _
  $region13: #{florence2_pad_detections.1} parent=0 // pred_fallthru
    _

</llo_original>
